<compile_context>
chip_gen: v5e
topology: v5e:2x2
jax: 0.10.0
libtpu: 0.0.40
codegen_flags: <defaults>
</compile_context>

<pallas_src>
import functools

import jax
import jax.numpy as jnp
from jax import lax
from jax.experimental import pallas as pl
from jax.experimental.pallas import tpu as pltpu


# ----------------------------- fused Pallas kernel --------------------------

def _fused_axial_kernel(
    w01_ref, b01_ref, w02_ref, b02_ref, w03_ref, b03_ref,   # axis-0 MLP
    w11_ref, b11_ref, w12_ref, b12_ref, w13_ref, b13_ref,   # axis-1 MLP
    out_ref,                                                 # (tile_n0, n1*dim)
    *, tile_n0, n1, dim,
):
    i = pl.program_id(0)

    def mlp(pos, w1_ref, b1_ref, w2_ref, b2_ref, w3_ref, b3_ref):
        # Linear(1, H): K=1 contraction == VPU broadcast-multiply (no MXU pass)
        h = pos * w1_ref[...] + b1_ref[...]
        h = h * jax.nn.sigmoid(h)                            # SiLU (EUP)
        # Linear(H, H) and Linear(H, dim) on the MXU, f32 accumulation
        h = jnp.dot(h, w2_ref[...], preferred_element_type=jnp.float32) + b2_ref[...]
        h = h * jax.nn.sigmoid(h)
        return jnp.dot(h, w3_ref[...], preferred_element_type=jnp.float32) + b3_ref[...]

    h0 = w01_ref.shape[1]
    h1 = w11_ref.shape[1]

    # axis-0 positions for this N0 tile, generated in-kernel (no HBM input).
    row0 = lax.broadcasted_iota(jnp.int32, (tile_n0, h0), 0) + i * tile_n0
    e0 = mlp(row0.astype(jnp.float32),
             w01_ref, b01_ref, w02_ref, b02_ref, w03_ref, b03_ref)  # (tile_n0, dim)

    # axis-1 positions: full axis, recomputed per step (cheap, all in vregs;
    # keeps every grid step independent so the N0 axis is truly "parallel").
    row1 = lax.broadcasted_iota(jnp.int32, (n1, h1), 0)
    e1 = mlp(row1.astype(jnp.float32),
             w11_ref, b11_ref, w12_ref, b12_ref, w13_ref, b13_ref)  # (n1, dim)

    # combine_factorized: out[i, j, :] = e0[i, :] + e1[j, :]
    # stored lane-dense as (tile_n0, n1*dim) for unmasked full-width stores.
    combined = e0[:, None, :] + e1[None, :, :]               # (tile_n0, n1, dim)
    out_ref[...] = combined.reshape(tile_n0, n1 * dim)


# ----------------------------- wrapper ---------------------------------------

def continuous_axial_pos_emb(axial_dims, all_params, *, tile_n0=None):
    """Equivalent of ContinuousAxialPositionalEmbedding.forward(axial_dims)."""
    assert len(axial_dims) == 2, "kernel covers num_axial_dims=2"
    # TODO(synk): for >2 axial dims, chain additional broadcast-add stages.
    n0, n1 = int(axial_dims[0]), int(axial_dims[1])
    p0, p1 = all_params
    (w01, b01), (w02, b02), (w03, b03) = p0
    (w11, b11), (w12, b12), (w13, b13) = p1
    dim = w03.shape[1]

    # Pick an N0 tile: must divide N0 and keep the (tile_n0, N1*dim) block
    # (x2 buffers) comfortably inside scoped VMEM on v7x (64 MiB physical).
    if tile_n0 is None:
        tile_n0 = min(n0, 256)
    tile_n0 = min(tile_n0, n0)
    if tile_n0 != n0 and (n0 % tile_n0 != 0 or tile_n0 % 8 != 0):
        tile_n0 = n0                       # fall back to a single tile
    grid = (n0 // tile_n0,)

    def full_spec(a):
        # Whole array resident in VMEM, constant block index -> not re-DMA'd.
        return pl.BlockSpec(a.shape, lambda i: (0,) * a.ndim)

    weights = (w01, b01, w02, b02, w03, b03, w11, b11, w12, b12, w13, b13)
    in_specs = [full_spec(a) for a in weights]

    kernel = functools.partial(_fused_axial_kernel,
                               tile_n0=tile_n0, n1=n1, dim=dim)

    out2d = pl.pallas_call(
        kernel,
        out_shape=jax.ShapeDtypeStruct((n0, n1 * dim), jnp.float32),
        grid=grid,
        in_specs=in_specs,
        out_specs=pl.BlockSpec((tile_n0, n1 * dim), lambda i: (i, 0)),
        compiler_params=pltpu.CompilerParams(
            dimension_semantics=("parallel",),     # shard N0 across TCs (v7x)
            vmem_limit_bytes=32 * 1024 * 1024,
        ),
    )(*weights)

    # Free, contiguous reshape back to the reference (N0, N1, dim) layout.
    # TODO(synk): if downstream consumes bf16, cast at the kernel's final
    # store instead (halves the dominant HBM writeback); kept f32 to match
    # the torch module's output dtype exactly.
    return out2d.reshape(n0, n1, dim)


# ----------------------------- parameter init --------------------------------

def init_mlp_params(key, dim, mlp_depth=2, mlp_expansion=2.0):
    """Deterministic synthetic init; same shapes as MLP(1, dim, depth, expansion)."""
    dim_in = 1
    hidden = int(mlp_expansion * max(dim_in, dim))
    layer_dims = []
    cur = dim_in
    for _ in range(mlp_depth):
        layer_dims.append((cur, hidden))
        cur = hidden
    layer_dims.append((cur, dim))
    params = []
    for (din, dout) in layer_dims:
        key, kw, kb = jax.random.split(key, 3)
        w = jax.random.normal(kw, (din, dout), jnp.float32) * 0.1
        b = jax.random.normal(kb, (1, dout), jnp.float32) * 0.1
        params.append((w, b))
    return params


# ----------------------------- reference (pure JAX) ---------------------------

def _silu(x):
    return x * jax.nn.sigmoid(x)


def reference(axial_dims, all_params):
    embeds = []
    for n, params in zip(axial_dims, all_params):
        x = jnp.arange(n, dtype=jnp.float32)[:, None]
        (w1, b1), (w2, b2), (w3, b3) = params
        h = _silu(x @ w1 + b1)
        h = _silu(h @ w2 + b2)
        embeds.append(h @ w3 + b3)
    e = embeds[0]
    for rest in embeds[1:]:
        e = e[..., None, :] + rest
    return e


# ----------------------------- main -------------------------------------------

if __name__ == "__main__":
    dim = 32
    num_axial_dims = 2
    axial_dims = (16, 8)

    key = jax.random.PRNGKey(0)
    keys = jax.random.split(key, num_axial_dims)
    all_params = [init_mlp_params(k, dim) for k in keys]

    out = continuous_axial_pos_emb(axial_dims, all_params, tile_n0=8)
    out = jax.block_until_ready(out)

    expected = reference(axial_dims, all_params)
    assert out.shape == (axial_dims[0], axial_dims[1], dim), out.shape
    assert out.dtype == jnp.float32
    assert jnp.allclose(out, expected, atol=1e-5, rtol=1e-5), (
        float(jnp.max(jnp.abs(out - expected)))
    )
    print("KERNEL_OK")
</pallas_src>

<mosaic_0001>
module attributes {stable_mosaic.version = 11 : i64} {
  func.func @_fused_axial_kernel(%arg0: i32, %arg1: memref<1x64xf32, #tpu.memory_space<vmem>>, %arg2: memref<1x64xf32, #tpu.memory_space<vmem>>, %arg3: memref<64x64xf32, #tpu.memory_space<vmem>>, %arg4: memref<1x64xf32, #tpu.memory_space<vmem>>, %arg5: memref<64x32xf32, #tpu.memory_space<vmem>>, %arg6: memref<1x32xf32, #tpu.memory_space<vmem>>, %arg7: memref<1x64xf32, #tpu.memory_space<vmem>>, %arg8: memref<1x64xf32, #tpu.memory_space<vmem>>, %arg9: memref<64x64xf32, #tpu.memory_space<vmem>>, %arg10: memref<1x64xf32, #tpu.memory_space<vmem>>, %arg11: memref<64x32xf32, #tpu.memory_space<vmem>>, %arg12: memref<1x32xf32, #tpu.memory_space<vmem>>, %arg13: memref<8x256xf32, #tpu.memory_space<vmem>>) attributes {dimension_semantics = [#tpu.dimension_semantics<parallel>], iteration_bounds = array<i64: 2>, scalar_prefetch = 0 : i64, scratch_operands = 0 : i64, tpu.core_type = #tpu.core_type<tc>, window_params = [{pipeline_mode = #tpu.pipeline_mode<synchronous>, transform_indices = @transform_0, window_bounds = array<i64: 1, 64>}, {pipeline_mode = #tpu.pipeline_mode<synchronous>, transform_indices = @transform_1, window_bounds = array<i64: 1, 64>}, {pipeline_mode = #tpu.pipeline_mode<synchronous>, transform_indices = @transform_2, window_bounds = array<i64: 64, 64>}, {pipeline_mode = #tpu.pipeline_mode<synchronous>, transform_indices = @transform_3, window_bounds = array<i64: 1, 64>}, {pipeline_mode = #tpu.pipeline_mode<synchronous>, transform_indices = @transform_4, window_bounds = array<i64: 64, 32>}, {pipeline_mode = #tpu.pipeline_mode<synchronous>, transform_indices = @transform_5, window_bounds = array<i64: 1, 32>}, {pipeline_mode = #tpu.pipeline_mode<synchronous>, transform_indices = @transform_6, window_bounds = array<i64: 1, 64>}, {pipeline_mode = #tpu.pipeline_mode<synchronous>, transform_indices = @transform_7, window_bounds = array<i64: 1, 64>}, {pipeline_mode = #tpu.pipeline_mode<synchronous>, transform_indices = @transform_8, window_bounds = array<i64: 64, 64>}, {pipeline_mode = #tpu.pipeline_mode<synchronous>, transform_indices = @transform_9, window_bounds = array<i64: 1, 64>}, {pipeline_mode = #tpu.pipeline_mode<synchronous>, transform_indices = @transform_10, window_bounds = array<i64: 64, 32>}, {pipeline_mode = #tpu.pipeline_mode<synchronous>, transform_indices = @transform_11, window_bounds = array<i64: 1, 32>}, {transform_indices = @transform_12, window_bounds = array<i64: 8, 256>}]} {
    %0 = tpu.iota {dimensions = array<i32: 0>} : vector<8x64xi32>
    %c8_i32 = arith.constant 8 : i32
    %1 = arith.muli %arg0, %c8_i32 : i32
    %2 = vector.broadcast %1 : i32 to vector<8x64xi32>
    %3 = arith.addi %0, %2 : vector<8x64xi32>
    %4 = arith.sitofp %3 : vector<8x64xi32> to vector<8x64xf32>
    %c0 = arith.constant 0 : index
    %c0_0 = arith.constant 0 : index
    %5 = vector.load %arg1[%c0, %c0_0] : memref<1x64xf32, #tpu.memory_space<vmem>>, vector<1x64xf32>
    %6 = vector.broadcast %5 : vector<1x64xf32> to vector<8x64xf32>
    %7 = arith.mulf %4, %6 : vector<8x64xf32>
    %c0_1 = arith.constant 0 : index
    %c0_2 = arith.constant 0 : index
    %8 = vector.load %arg2[%c0_1, %c0_2] : memref<1x64xf32, #tpu.memory_space<vmem>>, vector<1x64xf32>
    %9 = vector.broadcast %8 : vector<1x64xf32> to vector<8x64xf32>
    %10 = arith.addf %7, %9 : vector<8x64xf32>
    %11 = arith.negf %10 : vector<8x64xf32>
    %12 = math.exp %11 : vector<8x64xf32>
    %cst = arith.constant 1.000000e+00 : f32
    %13 = vector.broadcast %cst : f32 to vector<8x64xf32>
    %14 = arith.addf %13, %12 : vector<8x64xf32>
    %15 = arith.divf %13, %14 : vector<8x64xf32>
    %16 = arith.mulf %10, %15 : vector<8x64xf32>
    %c0_3 = arith.constant 0 : index
    %c0_4 = arith.constant 0 : index
    %17 = vector.load %arg3[%c0_3, %c0_4] : memref<64x64xf32, #tpu.memory_space<vmem>>, vector<64x64xf32>
    %cst_5 = arith.constant dense<0.000000e+00> : vector<8x64xf32>
    %18 = tpu.matmul %16, %17, %cst_5 {dimension_numbers = #tpu.dot_dimension_numbers<[1], [0], [0], [1], [0, 0, 1, 1], [], []>} : vector<8x64xf32>, vector<64x64xf32>, vector<8x64xf32> -> vector<8x64xf32>
    %c0_6 = arith.constant 0 : index
    %c0_7 = arith.constant 0 : index
    %19 = vector.load %arg4[%c0_6, %c0_7] : memref<1x64xf32, #tpu.memory_space<vmem>>, vector<1x64xf32>
    %20 = vector.broadcast %19 : vector<1x64xf32> to vector<8x64xf32>
    %21 = arith.addf %18, %20 : vector<8x64xf32>
    %22 = arith.negf %21 : vector<8x64xf32>
    %23 = math.exp %22 : vector<8x64xf32>
    %cst_8 = arith.constant 1.000000e+00 : f32
    %24 = vector.broadcast %cst_8 : f32 to vector<8x64xf32>
    %25 = arith.addf %24, %23 : vector<8x64xf32>
    %26 = arith.divf %24, %25 : vector<8x64xf32>
    %27 = arith.mulf %21, %26 : vector<8x64xf32>
    %c0_9 = arith.constant 0 : index
    %c0_10 = arith.constant 0 : index
    %28 = vector.load %arg5[%c0_9, %c0_10] : memref<64x32xf32, #tpu.memory_space<vmem>>, vector<64x32xf32>
    %cst_11 = arith.constant dense<0.000000e+00> : vector<8x32xf32>
    %29 = tpu.matmul %27, %28, %cst_11 {dimension_numbers = #tpu.dot_dimension_numbers<[1], [0], [0], [1], [0, 0, 1, 1], [], []>} : vector<8x64xf32>, vector<64x32xf32>, vector<8x32xf32> -> vector<8x32xf32>
    %c0_12 = arith.constant 0 : index
    %c0_13 = arith.constant 0 : index
    %30 = vector.load %arg6[%c0_12, %c0_13] : memref<1x32xf32, #tpu.memory_space<vmem>>, vector<1x32xf32>
    %31 = vector.broadcast %30 : vector<1x32xf32> to vector<8x32xf32>
    %32 = arith.addf %29, %31 : vector<8x32xf32>
    %33 = tpu.iota {dimensions = array<i32: 0>} : vector<8x64xi32>
    %34 = arith.sitofp %33 : vector<8x64xi32> to vector<8x64xf32>
    %c0_14 = arith.constant 0 : index
    %c0_15 = arith.constant 0 : index
    %35 = vector.load %arg7[%c0_14, %c0_15] : memref<1x64xf32, #tpu.memory_space<vmem>>, vector<1x64xf32>
    %36 = vector.broadcast %35 : vector<1x64xf32> to vector<8x64xf32>
    %37 = arith.mulf %34, %36 : vector<8x64xf32>
    %c0_16 = arith.constant 0 : index
    %c0_17 = arith.constant 0 : index
    %38 = vector.load %arg8[%c0_16, %c0_17] : memref<1x64xf32, #tpu.memory_space<vmem>>, vector<1x64xf32>
    %39 = vector.broadcast %38 : vector<1x64xf32> to vector<8x64xf32>
    %40 = arith.addf %37, %39 : vector<8x64xf32>
    %41 = arith.negf %40 : vector<8x64xf32>
    %42 = math.exp %41 : vector<8x64xf32>
    %cst_18 = arith.constant 1.000000e+00 : f32
    %43 = vector.broadcast %cst_18 : f32 to vector<8x64xf32>
    %44 = arith.addf %43, %42 : vector<8x64xf32>
    %45 = arith.divf %43, %44 : vector<8x64xf32>
    %46 = arith.mulf %40, %45 : vector<8x64xf32>
    %c0_19 = arith.constant 0 : index
    %c0_20 = arith.constant 0 : index
    %47 = vector.load %arg9[%c0_19, %c0_20] : memref<64x64xf32, #tpu.memory_space<vmem>>, vector<64x64xf32>
    %cst_21 = arith.constant dense<0.000000e+00> : vector<8x64xf32>
    %48 = tpu.matmul %46, %47, %cst_21 {dimension_numbers = #tpu.dot_dimension_numbers<[1], [0], [0], [1], [0, 0, 1, 1], [], []>} : vector<8x64xf32>, vector<64x64xf32>, vector<8x64xf32> -> vector<8x64xf32>
    %c0_22 = arith.constant 0 : index
    %c0_23 = arith.constant 0 : index
    %49 = vector.load %arg10[%c0_22, %c0_23] : memref<1x64xf32, #tpu.memory_space<vmem>>, vector<1x64xf32>
    %50 = vector.broadcast %49 : vector<1x64xf32> to vector<8x64xf32>
    %51 = arith.addf %48, %50 : vector<8x64xf32>
    %52 = arith.negf %51 : vector<8x64xf32>
    %53 = math.exp %52 : vector<8x64xf32>
    %cst_24 = arith.constant 1.000000e+00 : f32
    %54 = vector.broadcast %cst_24 : f32 to vector<8x64xf32>
    %55 = arith.addf %54, %53 : vector<8x64xf32>
    %56 = arith.divf %54, %55 : vector<8x64xf32>
    %57 = arith.mulf %51, %56 : vector<8x64xf32>
    %c0_25 = arith.constant 0 : index
    %c0_26 = arith.constant 0 : index
    %58 = vector.load %arg11[%c0_25, %c0_26] : memref<64x32xf32, #tpu.memory_space<vmem>>, vector<64x32xf32>
    %cst_27 = arith.constant dense<0.000000e+00> : vector<8x32xf32>
    %59 = tpu.matmul %57, %58, %cst_27 {dimension_numbers = #tpu.dot_dimension_numbers<[1], [0], [0], [1], [0, 0, 1, 1], [], []>} : vector<8x64xf32>, vector<64x32xf32>, vector<8x32xf32> -> vector<8x32xf32>
    %c0_28 = arith.constant 0 : index
    %c0_29 = arith.constant 0 : index
    %60 = vector.load %arg12[%c0_28, %c0_29] : memref<1x32xf32, #tpu.memory_space<vmem>>, vector<1x32xf32>
    %61 = vector.broadcast %60 : vector<1x32xf32> to vector<8x32xf32>
    %62 = arith.addf %59, %61 : vector<8x32xf32>
    %63 = vector.shape_cast %32 : vector<8x32xf32> to vector<8x1x32xf32>
    %64 = vector.shape_cast %62 : vector<8x32xf32> to vector<1x8x32xf32>
    %65 = vector.broadcast %63 : vector<8x1x32xf32> to vector<8x8x32xf32>
    %66 = vector.broadcast %64 : vector<1x8x32xf32> to vector<8x8x32xf32>
    %67 = arith.addf %65, %66 : vector<8x8x32xf32>
    %68 = vector.shape_cast %67 : vector<8x8x32xf32> to vector<8x256xf32>
    %c0_30 = arith.constant 0 : index
    %c0_31 = arith.constant 0 : index
    %69 = vector.load %arg13[%c0_30, %c0_31] : memref<8x256xf32, #tpu.memory_space<vmem>>, vector<8x256xf32>
    tpu.vector_store %arg13[%c0_30, %c0_31], %68 {strides = array<i32>} : memref<8x256xf32, #tpu.memory_space<vmem>>, vector<8x256xf32>,
    return
  }
  func.func @transform_0(%arg0: i32) -> (i32, i32) {
    %c0_i32 = arith.constant 0 : i32
    %c0_i32_0 = arith.constant 0 : i32
    %c0_i32_1 = arith.constant 0 : i32
    return %c0_i32, %c0_i32_0 : i32, i32
  }
  func.func @transform_1(%arg0: i32) -> (i32, i32) {
    %c0_i32 = arith.constant 0 : i32
    %c0_i32_0 = arith.constant 0 : i32
    %c0_i32_1 = arith.constant 0 : i32
    return %c0_i32, %c0_i32_0 : i32, i32
  }
  func.func @transform_2(%arg0: i32) -> (i32, i32) {
    %c0_i32 = arith.constant 0 : i32
    %c0_i32_0 = arith.constant 0 : i32
    %c0_i32_1 = arith.constant 0 : i32
    return %c0_i32, %c0_i32_0 : i32, i32
  }
  func.func @transform_3(%arg0: i32) -> (i32, i32) {
    %c0_i32 = arith.constant 0 : i32
    %c0_i32_0 = arith.constant 0 : i32
    %c0_i32_1 = arith.constant 0 : i32
    return %c0_i32, %c0_i32_0 : i32, i32
  }
  func.func @transform_4(%arg0: i32) -> (i32, i32) {
    %c0_i32 = arith.constant 0 : i32
    %c0_i32_0 = arith.constant 0 : i32
    %c0_i32_1 = arith.constant 0 : i32
    return %c0_i32, %c0_i32_0 : i32, i32
  }
  func.func @transform_5(%arg0: i32) -> (i32, i32) {
    %c0_i32 = arith.constant 0 : i32
    %c0_i32_0 = arith.constant 0 : i32
    %c0_i32_1 = arith.constant 0 : i32
    return %c0_i32, %c0_i32_0 : i32, i32
  }
  func.func @transform_6(%arg0: i32) -> (i32, i32) {
    %c0_i32 = arith.constant 0 : i32
    %c0_i32_0 = arith.constant 0 : i32
    %c0_i32_1 = arith.constant 0 : i32
    return %c0_i32, %c0_i32_0 : i32, i32
  }
  func.func @transform_7(%arg0: i32) -> (i32, i32) {
    %c0_i32 = arith.constant 0 : i32
    %c0_i32_0 = arith.constant 0 : i32
    %c0_i32_1 = arith.constant 0 : i32
    return %c0_i32, %c0_i32_0 : i32, i32
  }
  func.func @transform_8(%arg0: i32) -> (i32, i32) {
    %c0_i32 = arith.constant 0 : i32
    %c0_i32_0 = arith.constant 0 : i32
    %c0_i32_1 = arith.constant 0 : i32
    return %c0_i32, %c0_i32_0 : i32, i32
  }
  func.func @transform_9(%arg0: i32) -> (i32, i32) {
    %c0_i32 = arith.constant 0 : i32
    %c0_i32_0 = arith.constant 0 : i32
    %c0_i32_1 = arith.constant 0 : i32
    return %c0_i32, %c0_i32_0 : i32, i32
  }
  func.func @transform_10(%arg0: i32) -> (i32, i32) {
    %c0_i32 = arith.constant 0 : i32
    %c0_i32_0 = arith.constant 0 : i32
    %c0_i32_1 = arith.constant 0 : i32
    return %c0_i32, %c0_i32_0 : i32, i32
  }
  func.func @transform_11(%arg0: i32) -> (i32, i32) {
    %c0_i32 = arith.constant 0 : i32
    %c0_i32_0 = arith.constant 0 : i32
    %c0_i32_1 = arith.constant 0 : i32
    return %c0_i32, %c0_i32_0 : i32, i32
  }
  func.func @transform_12(%arg0: i32) -> (i32, i32) {
    %c0_i32 = arith.constant 0 : i32
    %c0_i32_0 = arith.constant 0 : i32
    return %arg0, %c0_i32 : i32, i32
  }
}

</mosaic_0001>

<llo_original>
// kernel: tpu_custom_call.1
$region0: #{tpu_custom_call.1}
  #allocation0 [shape = 'u32[]', space=smem, size = 0x4, offset = 0x4, fixed_abs, tag = 'smem constant byte address 0x4 - core index']
  #allocation1 [shape = 'u32[72,128]{1,0:T(1,128)}', space=vmem, size = 0x9000, scoped, tag = 'internal scratch']
  %s0 = inlined_call_operand.vmem [shape: f32[1,64], index: 0, kind: input, shape index: {}]
  %s1 = inlined_call_operand.vmem [shape: f32[1,64], index: 1, kind: input, shape index: {}]
  %s2 = inlined_call_operand.vmem [shape: f32[64,64], index: 2, kind: input, shape index: {}]
  %s3 = inlined_call_operand.vmem [shape: f32[1,64], index: 3, kind: input, shape index: {}]
  %s4 = inlined_call_operand.vmem [shape: f32[64,32], index: 4, kind: input, shape index: {}]
  %s5 = inlined_call_operand.vmem [shape: f32[1,32], index: 5, kind: input, shape index: {}]
  %s6 = inlined_call_operand.vmem [shape: f32[1,64], index: 6, kind: input, shape index: {}]
  %s7 = inlined_call_operand.vmem [shape: f32[1,64], index: 7, kind: input, shape index: {}]
  %s8 = inlined_call_operand.vmem [shape: f32[64,64], index: 8, kind: input, shape index: {}]
  %s9 = inlined_call_operand.vmem [shape: f32[1,64], index: 9, kind: input, shape index: {}]
  %s10 = inlined_call_operand.vmem [shape: f32[64,32], index: 10, kind: input, shape index: {}]
  %s11 = inlined_call_operand.vmem [shape: f32[1,32], index: 11, kind: input, shape index: {}]
  %s12 = inlined_call_operand.hbm [shape: f32[16,256], index: 12, kind: output, shape index: {}]
  %s13 = sld [smem:[#allocation0]]
  $region81: #{tpu_custom_call.1} parent=0
    _
  %s15 = ssub.s32 1, %s13
  %s16 = scalar_select 0, %s15, %s13
  $region1: #{tpu_custom_call.1} parent=0
    #allocation2 [shape = 'u8[16384]{0}', space=vmem, size = 0x4000, scoped, tag = 'output window, operand 0']
    #allocation3 [shape = 's32[2]{0}', space=sflag, size = 0x8, scoped, tag = 'scoped memory for tpu_custom_call.1']
    %17 = vsyncpa [#allocation3], 0
    %s18 = scalar_lea.sflag [#allocation3], 1
    %19 = vsyncpa %s18, 0
    loop: start=0, step=1, limit=4
    $region2: #{tpu_custom_call.1} parent=1 // loop_pre_header
      _
    $region3: #{tpu_custom_call.1} parent=1 // loop_header
      %s21 = sphi 0, %s25
      %p22 = scmp.ge.s32.totalorder %s21, 4
      %s29 = sphi 0, %s29
      %s31 = sphi 0, %s29
      %s32 = sphi 0, %s31
      %s46 = sphi 0, %s32
      %s50 = sphi 0, %s50
      %s52 = sphi 0, %s50
      %s53 = sphi 0, %s52
      %s67 = sphi 0, %s53
      %s71 = sphi 0, %s71
      %s73 = sphi 0, %s71
      %s74 = sphi 0, %s73
      %s88 = sphi 0, %s74
      %s92 = sphi 0, %s92
      %s94 = sphi 0, %s92
      %s95 = sphi 0, %s94
      %s109 = sphi 0, %s95
      %s113 = sphi 0, %s113
      %s115 = sphi 0, %s113
      %s116 = sphi 0, %s115
      %s130 = sphi 0, %s116
      %s134 = sphi 0, %s134
      %s136 = sphi 0, %s134
      %s137 = sphi 0, %s136
      %s151 = sphi 0, %s137
      %s155 = sphi 0, %s155
      %s157 = sphi 0, %s155
      %s158 = sphi 0, %s157
      %s172 = sphi 0, %s158
      %s176 = sphi 0, %s176
      %s178 = sphi 0, %s176
      %s179 = sphi 0, %s178
      %s193 = sphi 0, %s179
      %s197 = sphi 0, %s197
      %s199 = sphi 0, %s197
      %s200 = sphi 0, %s199
      %s214 = sphi 0, %s200
      %s218 = sphi 0, %s218
      %s220 = sphi 0, %s218
      %s221 = sphi 0, %s220
      %s235 = sphi 0, %s221
      %s239 = sphi 0, %s239
      %s241 = sphi 0, %s239
      %s242 = sphi 0, %s241
      %s256 = sphi 0, %s242
      %s260 = sphi 0, %s260
      %s262 = sphi 0, %s260
      %s263 = sphi 0, %s262
      %s277 = sphi 0, %s263
      %s283 = sphi 0, %s285
      %s286 = sphi 0, %s283
      %s287 = sphi 0, %s286
      %s303 = sphi 0, %s287
    $region4: #{tpu_custom_call.1} parent=1 // loop_header_branch
      %24 = sbr.rel (%p22) target = $region8
    $region5: #{tpu_custom_call.1} parent=1 // loop_body
      %s26 = ssub.s32 %s21, 1
      %s27 = ssub.s32 %s21, 2
      %s28 = sadd.s32 %s21, 1
      %s30 = sadd.s32 %s29, 1
      %p33 = scmp.eq.s32.totalorder %s21, 1
      %p34 = scmp.ne.s32.totalorder %s29, %s31
      %p35 = scmp.eq.s32.totalorder %s21, 0
      %p36 = por %p34, %p35
      %p37 = scmp.ne.s32.totalorder %s29, %s31
      %p38 = scmp.eq.s32.totalorder %s26, 1
      %p39 = por %p37, %p38
      %p40 = scmp.ne.s32.totalorder %s31, %s32
      %p41 = scmp.eq.s32.totalorder %s26, 0
      %p42 = por %p40, %p41
      %p43 = scmp.ne.s32.totalorder %s31, %s32
      %p44 = scmp.eq.s32.totalorder %s27, 1
      %p45 = por %p43, %p44
      %p47 = scmp.ne.s32.totalorder %s32, %s46
      %p48 = scmp.eq.s32.totalorder %s27, 0
      %p49 = por %p47, %p48
      %s51 = sadd.s32 %s50, 1
      %p54 = scmp.eq.s32.totalorder %s21, 1
      %p55 = scmp.ne.s32.totalorder %s50, %s52
      %p56 = scmp.eq.s32.totalorder %s21, 0
      %p57 = por %p55, %p56
      %p58 = scmp.ne.s32.totalorder %s50, %s52
      %p59 = scmp.eq.s32.totalorder %s26, 1
      %p60 = por %p58, %p59
      %p61 = scmp.ne.s32.totalorder %s52, %s53
      %p62 = scmp.eq.s32.totalorder %s26, 0
      %p63 = por %p61, %p62
      %p64 = scmp.ne.s32.totalorder %s52, %s53
      %p65 = scmp.eq.s32.totalorder %s27, 1
      %p66 = por %p64, %p65
      %p68 = scmp.ne.s32.totalorder %s53, %s67
      %p69 = scmp.eq.s32.totalorder %s27, 0
      %p70 = por %p68, %p69
      %s72 = sadd.s32 %s71, 1
      %p75 = scmp.eq.s32.totalorder %s21, 1
      %p76 = scmp.ne.s32.totalorder %s71, %s73
      %p77 = scmp.eq.s32.totalorder %s21, 0
      %p78 = por %p76, %p77
      %p79 = scmp.ne.s32.totalorder %s71, %s73
      %p80 = scmp.eq.s32.totalorder %s26, 1
      %p81 = por %p79, %p80
      %p82 = scmp.ne.s32.totalorder %s73, %s74
      %p83 = scmp.eq.s32.totalorder %s26, 0
      %p84 = por %p82, %p83
      %p85 = scmp.ne.s32.totalorder %s73, %s74
      %p86 = scmp.eq.s32.totalorder %s27, 1
      %p87 = por %p85, %p86
      %p89 = scmp.ne.s32.totalorder %s74, %s88
      %p90 = scmp.eq.s32.totalorder %s27, 0
      %p91 = por %p89, %p90
      %s93 = sadd.s32 %s92, 1
      %p96 = scmp.eq.s32.totalorder %s21, 1
      %p97 = scmp.ne.s32.totalorder %s92, %s94
      %p98 = scmp.eq.s32.totalorder %s21, 0
      %p99 = por %p97, %p98
      %p100 = scmp.ne.s32.totalorder %s92, %s94
      %p101 = scmp.eq.s32.totalorder %s26, 1
      %p102 = por %p100, %p101
      %p103 = scmp.ne.s32.totalorder %s94, %s95
      %p104 = scmp.eq.s32.totalorder %s26, 0
      %p105 = por %p103, %p104
      %p106 = scmp.ne.s32.totalorder %s94, %s95
      %p107 = scmp.eq.s32.totalorder %s27, 1
      %p108 = por %p106, %p107
      %p110 = scmp.ne.s32.totalorder %s95, %s109
      %p111 = scmp.eq.s32.totalorder %s27, 0
      %p112 = por %p110, %p111
      %s114 = sadd.s32 %s113, 1
      %p117 = scmp.eq.s32.totalorder %s21, 1
      %p118 = scmp.ne.s32.totalorder %s113, %s115
      %p119 = scmp.eq.s32.totalorder %s21, 0
      %p120 = por %p118, %p119
      %p121 = scmp.ne.s32.totalorder %s113, %s115
      %p122 = scmp.eq.s32.totalorder %s26, 1
      %p123 = por %p121, %p122
      %p124 = scmp.ne.s32.totalorder %s115, %s116
      %p125 = scmp.eq.s32.totalorder %s26, 0
      %p126 = por %p124, %p125
      %p127 = scmp.ne.s32.totalorder %s115, %s116
      %p128 = scmp.eq.s32.totalorder %s27, 1
      %p129 = por %p127, %p128
      %p131 = scmp.ne.s32.totalorder %s116, %s130
      %p132 = scmp.eq.s32.totalorder %s27, 0
      %p133 = por %p131, %p132
      %s135 = sadd.s32 %s134, 1
      %p138 = scmp.eq.s32.totalorder %s21, 1
      %p139 = scmp.ne.s32.totalorder %s134, %s136
      %p140 = scmp.eq.s32.totalorder %s21, 0
      %p141 = por %p139, %p140
      %p142 = scmp.ne.s32.totalorder %s134, %s136
      %p143 = scmp.eq.s32.totalorder %s26, 1
      %p144 = por %p142, %p143
      %p145 = scmp.ne.s32.totalorder %s136, %s137
      %p146 = scmp.eq.s32.totalorder %s26, 0
      %p147 = por %p145, %p146
      %p148 = scmp.ne.s32.totalorder %s136, %s137
      %p149 = scmp.eq.s32.totalorder %s27, 1
      %p150 = por %p148, %p149
      %p152 = scmp.ne.s32.totalorder %s137, %s151
      %p153 = scmp.eq.s32.totalorder %s27, 0
      %p154 = por %p152, %p153
      %s156 = sadd.s32 %s155, 1
      %p159 = scmp.eq.s32.totalorder %s21, 1
      %p160 = scmp.ne.s32.totalorder %s155, %s157
      %p161 = scmp.eq.s32.totalorder %s21, 0
      %p162 = por %p160, %p161
      %p163 = scmp.ne.s32.totalorder %s155, %s157
      %p164 = scmp.eq.s32.totalorder %s26, 1
      %p165 = por %p163, %p164
      %p166 = scmp.ne.s32.totalorder %s157, %s158
      %p167 = scmp.eq.s32.totalorder %s26, 0
      %p168 = por %p166, %p167
      %p169 = scmp.ne.s32.totalorder %s157, %s158
      %p170 = scmp.eq.s32.totalorder %s27, 1
      %p171 = por %p169, %p170
      %p173 = scmp.ne.s32.totalorder %s158, %s172
      %p174 = scmp.eq.s32.totalorder %s27, 0
      %p175 = por %p173, %p174
      %s177 = sadd.s32 %s176, 1
      %p180 = scmp.eq.s32.totalorder %s21, 1
      %p181 = scmp.ne.s32.totalorder %s176, %s178
      %p182 = scmp.eq.s32.totalorder %s21, 0
      %p183 = por %p181, %p182
      %p184 = scmp.ne.s32.totalorder %s176, %s178
      %p185 = scmp.eq.s32.totalorder %s26, 1
      %p186 = por %p184, %p185
      %p187 = scmp.ne.s32.totalorder %s178, %s179
      %p188 = scmp.eq.s32.totalorder %s26, 0
      %p189 = por %p187, %p188
      %p190 = scmp.ne.s32.totalorder %s178, %s179
      %p191 = scmp.eq.s32.totalorder %s27, 1
      %p192 = por %p190, %p191
      %p194 = scmp.ne.s32.totalorder %s179, %s193
      %p195 = scmp.eq.s32.totalorder %s27, 0
      %p196 = por %p194, %p195
      %s198 = sadd.s32 %s197, 1
      %p201 = scmp.eq.s32.totalorder %s21, 1
      %p202 = scmp.ne.s32.totalorder %s197, %s199
      %p203 = scmp.eq.s32.totalorder %s21, 0
      %p204 = por %p202, %p203
      %p205 = scmp.ne.s32.totalorder %s197, %s199
      %p206 = scmp.eq.s32.totalorder %s26, 1
      %p207 = por %p205, %p206
      %p208 = scmp.ne.s32.totalorder %s199, %s200
      %p209 = scmp.eq.s32.totalorder %s26, 0
      %p210 = por %p208, %p209
      %p211 = scmp.ne.s32.totalorder %s199, %s200
      %p212 = scmp.eq.s32.totalorder %s27, 1
      %p213 = por %p211, %p212
      %p215 = scmp.ne.s32.totalorder %s200, %s214
      %p216 = scmp.eq.s32.totalorder %s27, 0
      %p217 = por %p215, %p216
      %s219 = sadd.s32 %s218, 1
      %p222 = scmp.eq.s32.totalorder %s21, 1
      %p223 = scmp.ne.s32.totalorder %s218, %s220
      %p224 = scmp.eq.s32.totalorder %s21, 0
      %p225 = por %p223, %p224
      %p226 = scmp.ne.s32.totalorder %s218, %s220
      %p227 = scmp.eq.s32.totalorder %s26, 1
      %p228 = por %p226, %p227
      %p229 = scmp.ne.s32.totalorder %s220, %s221
      %p230 = scmp.eq.s32.totalorder %s26, 0
      %p231 = por %p229, %p230
      %p232 = scmp.ne.s32.totalorder %s220, %s221
      %p233 = scmp.eq.s32.totalorder %s27, 1
      %p234 = por %p232, %p233
      %p236 = scmp.ne.s32.totalorder %s221, %s235
      %p237 = scmp.eq.s32.totalorder %s27, 0
      %p238 = por %p236, %p237
      %s240 = sadd.s32 %s239, 1
      %p243 = scmp.eq.s32.totalorder %s21, 1
      %p244 = scmp.ne.s32.totalorder %s239, %s241
      %p245 = scmp.eq.s32.totalorder %s21, 0
      %p246 = por %p244, %p245
      %p247 = scmp.ne.s32.totalorder %s239, %s241
      %p248 = scmp.eq.s32.totalorder %s26, 1
      %p249 = por %p247, %p248
      %p250 = scmp.ne.s32.totalorder %s241, %s242
      %p251 = scmp.eq.s32.totalorder %s26, 0
      %p252 = por %p250, %p251
      %p253 = scmp.ne.s32.totalorder %s241, %s242
      %p254 = scmp.eq.s32.totalorder %s27, 1
      %p255 = por %p253, %p254
      %p257 = scmp.ne.s32.totalorder %s242, %s256
      %p258 = scmp.eq.s32.totalorder %s27, 0
      %p259 = por %p257, %p258
      %s261 = sadd.s32 %s260, 1
      %p264 = scmp.eq.s32.totalorder %s21, 1
      %p265 = scmp.ne.s32.totalorder %s260, %s262
      %p266 = scmp.eq.s32.totalorder %s21, 0
      %p267 = por %p265, %p266
      %p268 = scmp.ne.s32.totalorder %s260, %s262
      %p269 = scmp.eq.s32.totalorder %s26, 1
      %p270 = por %p268, %p269
      %p271 = scmp.ne.s32.totalorder %s262, %s263
      %p272 = scmp.eq.s32.totalorder %s26, 0
      %p273 = por %p271, %p272
      %p274 = scmp.ne.s32.totalorder %s262, %s263
      %p275 = scmp.eq.s32.totalorder %s27, 1
      %p276 = por %p274, %p275
      %p278 = scmp.ne.s32.totalorder %s263, %s277
      %p279 = scmp.eq.s32.totalorder %s27, 0
      %p280 = por %p278, %p279
      %s281 = ssub.s32 %s21, %s28
      %p282 = scmp.eq.s32.totalorder %s281, 0
      %s284 = sadd.s32 %s283, 1
      %s285 = scalar_select %p282, %s283, %s284
      %p288 = pneg %p282
      %p289 = scmp.eq.s32.totalorder %s21, 1
      %p290 = por %p288, %p289
      %p291 = scmp.ne.s32.totalorder %s283, %s286
      %p292 = scmp.eq.s32.totalorder %s21, 0
      %p293 = por %p291, %p292
      %p294 = scmp.ne.s32.totalorder %s283, %s286
      %p295 = scmp.eq.s32.totalorder %s26, 1
      %p296 = por %p294, %p295
      %p297 = scmp.ne.s32.totalorder %s286, %s287
      %p298 = scmp.eq.s32.totalorder %s26, 0
      %p299 = por %p297, %p298
      %p300 = scmp.ne.s32.totalorder %s286, %s287
      %p301 = scmp.eq.s32.totalorder %s27, 1
      %p302 = por %p300, %p301
      %p304 = scmp.ne.s32.totalorder %s287, %s303
      %p305 = scmp.eq.s32.totalorder %s27, 0
      %p306 = por %p304, %p305
      %p307 = scmp.le.s32.totalorder 1, %s21
      %p308 = scmp.lt.s32.totalorder %s21, 3
      %p309 = pnand %p307, %p308
      %p310 = pneg %p309
      // Predicated region
      $region9: #{tpu_custom_call.1} parent=5 // pred_check
        _
      $region10: #{tpu_custom_call.1} parent=5 // pred_check_branch
        %312 = sbr.rel (%p309) target = $region12
      $region11: #{tpu_custom_call.1} parent=5 // pred_region
        %s313 = ssub.s32 %s21, 1
        // Predicated region
        $region13: #{tpu_custom_call.1} parent=11 // pred_check
          %p314 = pneg %p42
        $region14: #{tpu_custom_call.1} parent=11 // pred_check_branch
          %316 = sbr.rel (%p314) target = $region16
        $region15: #{tpu_custom_call.1} parent=11 // pred_region
          _
        $region16: #{tpu_custom_call.1} parent=11 // pred_fallthru
          _
        // Predicated region
        $region17: #{tpu_custom_call.1} parent=11 // pred_check
          %p317 = pneg %p63
        $region18: #{tpu_custom_call.1} parent=11 // pred_check_branch
          %319 = sbr.rel (%p317) target = $region20
        $region19: #{tpu_custom_call.1} parent=11 // pred_region
          _
        $region20: #{tpu_custom_call.1} parent=11 // pred_fallthru
          _
        // Predicated region
        $region21: #{tpu_custom_call.1} parent=11 // pred_check
          %p320 = pneg %p84
        $region22: #{tpu_custom_call.1} parent=11 // pred_check_branch
          %322 = sbr.rel (%p320) target = $region24
        $region23: #{tpu_custom_call.1} parent=11 // pred_region
          _
        $region24: #{tpu_custom_call.1} parent=11 // pred_fallthru
          _
        // Predicated region
        $region25: #{tpu_custom_call.1} parent=11 // pred_check
          %p323 = pneg %p105
        $region26: #{tpu_custom_call.1} parent=11 // pred_check_branch
          %325 = sbr.rel (%p323) target = $region28
        $region27: #{tpu_custom_call.1} parent=11 // pred_region
          _
        $region28: #{tpu_custom_call.1} parent=11 // pred_fallthru
          _
        // Predicated region
        $region29: #{tpu_custom_call.1} parent=11 // pred_check
          %p326 = pneg %p126
        $region30: #{tpu_custom_call.1} parent=11 // pred_check_branch
          %328 = sbr.rel (%p326) target = $region32
        $region31: #{tpu_custom_call.1} parent=11 // pred_region
          _
        $region32: #{tpu_custom_call.1} parent=11 // pred_fallthru
          _
        // Predicated region
        $region33: #{tpu_custom_call.1} parent=11 // pred_check
          %p329 = pneg %p147
        $region34: #{tpu_custom_call.1} parent=11 // pred_check_branch
          %331 = sbr.rel (%p329) target = $region36
        $region35: #{tpu_custom_call.1} parent=11 // pred_region
          _
        $region36: #{tpu_custom_call.1} parent=11 // pred_fallthru
          _
        // Predicated region
        $region37: #{tpu_custom_call.1} parent=11 // pred_check
          %p332 = pneg %p168
        $region38: #{tpu_custom_call.1} parent=11 // pred_check_branch
          %334 = sbr.rel (%p332) target = $region40
        $region39: #{tpu_custom_call.1} parent=11 // pred_region
          _
        $region40: #{tpu_custom_call.1} parent=11 // pred_fallthru
          _
        // Predicated region
        $region41: #{tpu_custom_call.1} parent=11 // pred_check
          %p335 = pneg %p189
        $region42: #{tpu_custom_call.1} parent=11 // pred_check_branch
          %337 = sbr.rel (%p335) target = $region44
        $region43: #{tpu_custom_call.1} parent=11 // pred_region
          _
        $region44: #{tpu_custom_call.1} parent=11 // pred_fallthru
          _
        // Predicated region
        $region45: #{tpu_custom_call.1} parent=11 // pred_check
          %p338 = pneg %p210
        $region46: #{tpu_custom_call.1} parent=11 // pred_check_branch
          %340 = sbr.rel (%p338) target = $region48
        $region47: #{tpu_custom_call.1} parent=11 // pred_region
          _
        $region48: #{tpu_custom_call.1} parent=11 // pred_fallthru
          _
        // Predicated region
        $region49: #{tpu_custom_call.1} parent=11 // pred_check
          %p341 = pneg %p231
        $region50: #{tpu_custom_call.1} parent=11 // pred_check_branch
          %343 = sbr.rel (%p341) target = $region52
        $region51: #{tpu_custom_call.1} parent=11 // pred_region
          _
        $region52: #{tpu_custom_call.1} parent=11 // pred_fallthru
          _
        // Predicated region
        $region53: #{tpu_custom_call.1} parent=11 // pred_check
          %p344 = pneg %p252
        $region54: #{tpu_custom_call.1} parent=11 // pred_check_branch
          %346 = sbr.rel (%p344) target = $region56
        $region55: #{tpu_custom_call.1} parent=11 // pred_region
          _
        $region56: #{tpu_custom_call.1} parent=11 // pred_fallthru
          _
        // Predicated region
        $region57: #{tpu_custom_call.1} parent=11 // pred_check
          %p347 = pneg %p273
        $region58: #{tpu_custom_call.1} parent=11 // pred_check_branch
          %349 = sbr.rel (%p347) target = $region60
        $region59: #{tpu_custom_call.1} parent=11 // pred_region
          _
        $region60: #{tpu_custom_call.1} parent=11 // pred_fallthru
          _
      $region12: #{tpu_custom_call.1} parent=5 // pred_fallthru
        _
      %p350 = scmp.lt.s32.totalorder %s21, 2
      // Predicated region
      $region61: #{tpu_custom_call.1} parent=5 // pred_check
        %p351 = pneg %p350
      $region62: #{tpu_custom_call.1} parent=5 // pred_check_branch
        %353 = sbr.rel (%p351) target = $region64
      $region63: #{tpu_custom_call.1} parent=5 // pred_region
        _
      $region64: #{tpu_custom_call.1} parent=5 // pred_fallthru
        _
      %p354 = scmp.le.s32.totalorder 1, %s21
      %p355 = scmp.lt.s32.totalorder %s21, 3
      %p356 = pnand %p354, %p355
      %p357 = pneg %p356
      // Predicated region
      $region65: #{tpu_custom_call.1} parent=5 // pred_check
        _
      $region66: #{tpu_custom_call.1} parent=5 // pred_check_branch
        %359 = sbr.rel (%p356) target = $region68
      $region67: #{tpu_custom_call.1} parent=5 // pred_region
        %s360 = ssub.s32 %s21, 1
        %p361 = pneg %p42
        %p362 = pneg %p39
        %p363 = pneg %p63
        %p364 = pneg %p60
        %p365 = pneg %p84
        %p366 = pneg %p81
        %p367 = pneg %p105
        %p368 = pneg %p102
        %p369 = pneg %p126
        %p370 = pneg %p123
        %p371 = pneg %p147
        %p372 = pneg %p144
        %p373 = pneg %p168
        %p374 = pneg %p165
        %p375 = pneg %p189
        %p376 = pneg %p186
        %p377 = pneg %p210
        %p378 = pneg %p207
        %p379 = pneg %p231
        %p380 = pneg %p228
        %p381 = pneg %p252
        %p382 = pneg %p249
        %p383 = pneg %p273
        %p384 = pneg %p270
        %p385 = pneg %p299
        %p386 = pneg %p296
        %s387 = sand.u32 %s286, 1
        %s388 = scalar_lea.sflag [#allocation3], %s387
        %s389 = sand.u32 %s286, 1
        %s390 = smul.addr %s389, 16
        %s391 = scalar_lea.vmem [#allocation2], %s390
        %v392 = vlaneseq
        %v393 = vshrl.u32 %v392, 7
        %s394 = smul.u32 %s26, 8
        %v395 = vstv %s394
        %v396 = vadd.s32 %v393, %v395
        %v397 = vcvt.s32.f32 %v396
        %v398 = vld [vmem:[%s0] sm:$0x1]
        %v400 = vperm.slane %v398, 0
        %v402 = vmul.f32 %v397, %v400
        %v403 = vld [vmem:[%s1] sm:$0x1]
        %v405 = vperm.slane %v403, 0
        %v407 = vadd.f32 %v402, %v405
        %v408 = vxor.u32 %v407, 2147483648
        %v409 = vmul.f32 %v408, 1.442695
        %v410 = vpow.pop %v409
        %v411 = vadd.f32 %v410, 1.0
        %v412 = vrcp.pop %v411
        %v413 = vmul.f32 %v411, %v412
        %v414 = vsub.f32 1.0, %v413
        %v415 = vmul.f32 %v412, %v414
        %v416 = vadd.f32 %v412, %v415
        %vm417 = vweird.f32 %v411
        %vm418 = vweird.f32 %v412
        %vm419 = vmor %vm417, %vm418
        %v420 = vsel %vm419, %v412, %v416
        %v421 = vand.u32 2147483647, %v411
        %vm422 = vcmp.eq.f32.partialorder %v421, 8.507059e+37
        %v423 = vand.u32 %v411, 2147483648
        %v424 = vor.u32 1.1754944e-38, %v423
        %v425 = vsel %vm422, %v424, %v420
        %v426 = vmul.f32 1.0, %v425
        %v427 = vmul.f32 %v407, %v426
        %v428 = vld [vmem:[%s2] sm:$0xff]
        %v429 = vld [vmem:[%s2 + $0x8] sm:$0xff]
        %v430 = vld [vmem:[%s2 + $0x10] sm:$0xff]
        %v431 = vld [vmem:[%s2 + $0x18] sm:$0xff]
        %v432 = vld [vmem:[%s2 + $0x20] sm:$0xff]
        %v433 = vld [vmem:[%s2 + $0x28] sm:$0xff]
        %v434 = vld [vmem:[%s2 + $0x30] sm:$0xff]
        %v435 = vld [vmem:[%s2 + $0x38] sm:$0xff]
        %v436 = vld [vmem:[%s3] sm:$0x1]
        %v438 = vperm.slane %v436, 0
        %vm440 = vcmask 523264
        %v442 = vsel %vm440, %v427, 0
        %444 = vmatpush.msra.mxu0 0.0
        %445 = vmatpush.msra.mxu0 0.0
        %446 = vmatpush.msra.mxu0 0.0
        %447 = vmatpush.msra.mxu0 0.0
        %448 = vmatpush.msra.mxu0 0.0
        %449 = vmatpush.msra.mxu0 0.0
        %450 = vmatpush.msra.mxu0 0.0
        %451 = vmatpush.msra.mxu0 0.0
        %452 = vmatpush.msra.mxu0 %v435
        %453 = vmatpush.msra.mxu0 %v434
        %454 = vmatpush.msra.mxu0 %v433
        %455 = vmatpush.msra.mxu0 %v432
        %456 = vmatpush.msra.mxu0 %v431
        %457 = vmatpush.msra.mxu0 %v430
        %458 = vmatpush.msra.mxu0 %v429
        %459 = vmatpush.msra.mxu0 %v428
        %460 = vmatmul.f32.gmra.mxu0 %v442
        %v461 = vpop.f32.mrf.mxu0
        %v462 = vadd.f32 %v438, %v461
        %463 = vdwg.mxu0
        %v464 = vxor.u32 %v462, 2147483648
        %v465 = vmul.f32 %v464, 1.442695
        %v466 = vpow.pop %v465
        %v467 = vadd.f32 %v466, 1.0
        %v468 = vrcp.pop %v467
        %v469 = vmul.f32 %v467, %v468
        %v470 = vsub.f32 1.0, %v469
        %v471 = vmul.f32 %v468, %v470
        %v472 = vadd.f32 %v468, %v471
        %vm473 = vweird.f32 %v467
        %vm474 = vweird.f32 %v468
        %vm475 = vmor %vm473, %vm474
        %v476 = vsel %vm475, %v468, %v472
        %v477 = vand.u32 2147483647, %v467
        %vm478 = vcmp.eq.f32.partialorder %v477, 8.507059e+37
        %v479 = vand.u32 %v467, 2147483648
        %v480 = vor.u32 1.1754944e-38, %v479
        %v481 = vsel %vm478, %v480, %v476
        %v482 = vmul.f32 1.0, %v481
        %v483 = vmul.f32 %v462, %v482
        %v484 = vld [vmem:[%s4] sm:$0xff]
        %v485 = vld [vmem:[%s4 + $0x8] sm:$0xff]
        %v486 = vld [vmem:[%s4 + $0x10] sm:$0xff]
        %v487 = vld [vmem:[%s4 + $0x18] sm:$0xff]
        %v488 = vld [vmem:[%s4 + $0x20] sm:$0xff]
        %v489 = vld [vmem:[%s4 + $0x28] sm:$0xff]
        %v490 = vld [vmem:[%s4 + $0x30] sm:$0xff]
        %v491 = vld [vmem:[%s4 + $0x38] sm:$0xff]
        %v492 = vld [vmem:[%s5] sm:$0x1]
        %v494 = vperm.slane %v492, 0
        %v497 = vsel %vm440, %v483, 0
        %499 = vmatpush.msra.mxu0 0.0
        %500 = vmatpush.msra.mxu0 0.0
        %501 = vmatpush.msra.mxu0 0.0
        %502 = vmatpush.msra.mxu0 0.0
        %503 = vmatpush.msra.mxu0 0.0
        %504 = vmatpush.msra.mxu0 0.0
        %505 = vmatpush.msra.mxu0 0.0
        %506 = vmatpush.msra.mxu0 0.0
        %507 = vmatpush.msra.mxu0 %v491
        %508 = vmatpush.msra.mxu0 %v490
        %509 = vmatpush.msra.mxu0 %v489
        %510 = vmatpush.msra.mxu0 %v488
        %511 = vmatpush.msra.mxu0 %v487
        %512 = vmatpush.msra.mxu0 %v486
        %513 = vmatpush.msra.mxu0 %v485
        %514 = vmatpush.msra.mxu0 %v484
        %515 = vmatmul.f32.gmra.mxu0 %v497
        %v516 = vpop.f32.mrf.mxu0
        %v517 = vadd.f32 %v494, %v516
        %518 = vdwg.mxu0
        %v519 = vcvt.s32.f32 %v393
        %v520 = vld [vmem:[%s6] sm:$0x1]
        %v522 = vperm.slane %v520, 0
        %v524 = vmul.f32 %v519, %v522
        %v525 = vld [vmem:[%s7] sm:$0x1]
        %v527 = vperm.slane %v525, 0
        %v529 = vadd.f32 %v524, %v527
        %v530 = vxor.u32 %v529, 2147483648
        %v531 = vmul.f32 %v530, 1.442695
        %v532 = vpow.pop %v531
        %v533 = vadd.f32 %v532, 1.0
        %v534 = vrcp.pop %v533
        %v535 = vmul.f32 %v533, %v534
        %v536 = vsub.f32 1.0, %v535
        %v537 = vmul.f32 %v534, %v536
        %v538 = vadd.f32 %v534, %v537
        %vm539 = vweird.f32 %v533
        %vm540 = vweird.f32 %v534
        %vm541 = vmor %vm539, %vm540
        %v542 = vsel %vm541, %v534, %v538
        %v543 = vand.u32 2147483647, %v533
        %vm544 = vcmp.eq.f32.partialorder %v543, 8.507059e+37
        %v545 = vand.u32 %v533, 2147483648
        %v546 = vor.u32 1.1754944e-38, %v545
        %v547 = vsel %vm544, %v546, %v542
        %v548 = vmul.f32 1.0, %v547
        %v549 = vmul.f32 %v529, %v548
        %v550 = vld [vmem:[%s8] sm:$0xff]
        %v551 = vld [vmem:[%s8 + $0x8] sm:$0xff]
        %v552 = vld [vmem:[%s8 + $0x10] sm:$0xff]
        %v553 = vld [vmem:[%s8 + $0x18] sm:$0xff]
        %v554 = vld [vmem:[%s8 + $0x20] sm:$0xff]
        %v555 = vld [vmem:[%s8 + $0x28] sm:$0xff]
        %v556 = vld [vmem:[%s8 + $0x30] sm:$0xff]
        %v557 = vld [vmem:[%s8 + $0x38] sm:$0xff]
        %v558 = vld [vmem:[%s9] sm:$0x1]
        %v560 = vperm.slane %v558, 0
        %v563 = vsel %vm440, %v549, 0
        %565 = vmatpush.msra.mxu0 0.0
        %566 = vmatpush.msra.mxu0 0.0
        %567 = vmatpush.msra.mxu0 0.0
        %568 = vmatpush.msra.mxu0 0.0
        %569 = vmatpush.msra.mxu0 0.0
        %570 = vmatpush.msra.mxu0 0.0
        %571 = vmatpush.msra.mxu0 0.0
        %572 = vmatpush.msra.mxu0 0.0
        %573 = vmatpush.msra.mxu0 %v557
        %574 = vmatpush.msra.mxu0 %v556
        %575 = vmatpush.msra.mxu0 %v555
        %576 = vmatpush.msra.mxu0 %v554
        %577 = vmatpush.msra.mxu0 %v553
        %578 = vmatpush.msra.mxu0 %v552
        %579 = vmatpush.msra.mxu0 %v551
        %580 = vmatpush.msra.mxu0 %v550
        %581 = vmatmul.f32.gmra.mxu0 %v563
        %v582 = vpop.f32.mrf.mxu0
        %v583 = vadd.f32 %v560, %v582
        %584 = vdwg.mxu0
        %v585 = vxor.u32 %v583, 2147483648
        %v586 = vmul.f32 %v585, 1.442695
        %v587 = vpow.pop %v586
        %v588 = vadd.f32 %v587, 1.0
        %v589 = vrcp.pop %v588
        %v590 = vmul.f32 %v588, %v589
        %v591 = vsub.f32 1.0, %v590
        %v592 = vmul.f32 %v589, %v591
        %v593 = vadd.f32 %v589, %v592
        %vm594 = vweird.f32 %v588
        %vm595 = vweird.f32 %v589
        %vm596 = vmor %vm594, %vm595
        %v597 = vsel %vm596, %v589, %v593
        %v598 = vand.u32 2147483647, %v588
        %vm599 = vcmp.eq.f32.partialorder %v598, 8.507059e+37
        %v600 = vand.u32 %v588, 2147483648
        %v601 = vor.u32 1.1754944e-38, %v600
        %v602 = vsel %vm599, %v601, %v597
        %v603 = vmul.f32 1.0, %v602
        %v604 = vmul.f32 %v583, %v603
        %v605 = vld [vmem:[%s10] sm:$0xff]
        %v606 = vld [vmem:[%s10 + $0x8] sm:$0xff]
        %v607 = vld [vmem:[%s10 + $0x10] sm:$0xff]
        %v608 = vld [vmem:[%s10 + $0x18] sm:$0xff]
        %v609 = vld [vmem:[%s10 + $0x20] sm:$0xff]
        %v610 = vld [vmem:[%s10 + $0x28] sm:$0xff]
        %v611 = vld [vmem:[%s10 + $0x30] sm:$0xff]
        %v612 = vld [vmem:[%s10 + $0x38] sm:$0xff]
        %v613 = vld [vmem:[%s11] sm:$0x1]
        %v615 = vperm.slane %v613, 0
        %v618 = vsel %vm440, %v604, 0
        %620 = vmatpush.msra.mxu0 0.0
        %621 = vmatpush.msra.mxu0 0.0
        %622 = vmatpush.msra.mxu0 0.0
        %623 = vmatpush.msra.mxu0 0.0
        %624 = vmatpush.msra.mxu0 0.0
        %625 = vmatpush.msra.mxu0 0.0
        %626 = vmatpush.msra.mxu0 0.0
        %627 = vmatpush.msra.mxu0 0.0
        %628 = vmatpush.msra.mxu0 %v612
        %629 = vmatpush.msra.mxu0 %v611
        %630 = vmatpush.msra.mxu0 %v610
        %631 = vmatpush.msra.mxu0 %v609
        %632 = vmatpush.msra.mxu0 %v608
        %633 = vmatpush.msra.mxu0 %v607
        %634 = vmatpush.msra.mxu0 %v606
        %635 = vmatpush.msra.mxu0 %v605
        %636 = vmatmul.f32.gmra.mxu0 %v618
        %v637 = vpop.f32.mrf.mxu0
        %v638 = vadd.f32 %v615, %v637
        %639 = vdwg.mxu0
        %v641 = vrot.slane %v517, 1
        %v642 = vrot.slane %v517, 2
        %v643 = vrot.slane %v517, 3
        %v644 = vrot.slane %v517, 4
        %v645 = vrot.slane %v517, 5
        %v646 = vrot.slane %v517, 6
        %v647 = vrot.slane %v517, 7
        %v648 = vperm.slane %v517, 0
        %v649 = vperm.slane %v641, 0
        %v650 = vperm.slane %v642, 0
        %v651 = vperm.slane %v643, 0
        %v652 = vperm.slane %v644, 0
        %v653 = vperm.slane %v645, 0
        %v654 = vperm.slane %v646, 0
        %v655 = vperm.slane %v647, 0
        %v664 = vadd.f32 %v648, %v638
        %v665 = vadd.f32 %v649, %v638
        %v666 = vadd.f32 %v650, %v638
        %v667 = vadd.f32 %v651, %v638
        %v668 = vadd.f32 %v652, %v638
        %v669 = vadd.f32 %v653, %v638
        %v670 = vadd.f32 %v654, %v638
        %v671 = vadd.f32 %v655, %v638
        %v672 = vrot.slane %v666, 4
        %vm673 = vcmask 1047556
        %v674 = vsel %vm673, %v672, %v664
        %v675 = vrot.slane %v664, 4
        %v676 = vsel %vm673, %v666, %v675
        %v678 = vunpack.c.l.s4 1983009808
        %v679 = vunpack.c.0.s8 %v678
        %v680 = vperm.slane %v674, %v679
        %v682 = vunpack.c.l.s4 1983009808
        %v683 = vunpack.c.0.s8 %v682
        %v684 = vperm.slane %v676, %v683
        %v685 = vrot.slane %v667, 4
        %v686 = vsel %vm673, %v685, %v665
        %v687 = vrot.slane %v665, 4
        %v688 = vsel %vm673, %v667, %v687
        %v690 = vunpack.c.l.s4 1983009808
        %v691 = vunpack.c.0.s8 %v690
        %v692 = vperm.slane %v686, %v691
        %v694 = vunpack.c.l.s4 1983009808
        %v695 = vunpack.c.0.s8 %v694
        %v696 = vperm.slane %v688, %v695
        %v697 = vrot.slane %v670, 4
        %v698 = vsel %vm673, %v697, %v668
        %v699 = vrot.slane %v668, 4
        %v700 = vsel %vm673, %v670, %v699
        %v702 = vunpack.c.l.s4 1983009808
        %v703 = vunpack.c.0.s8 %v702
        %v704 = vperm.slane %v698, %v703
        %v706 = vunpack.c.l.s4 1983009808
        %v707 = vunpack.c.0.s8 %v706
        %v708 = vperm.slane %v700, %v707
        %v709 = vrot.slane %v671, 4
        %v710 = vsel %vm673, %v709, %v669
        %v711 = vrot.slane %v669, 4
        %v712 = vsel %vm673, %v671, %v711
        %v714 = vunpack.c.l.s4 1983009808
        %v715 = vunpack.c.0.s8 %v714
        %v716 = vperm.slane %v710, %v715
        %v718 = vunpack.c.l.s4 1983009808
        %v719 = vunpack.c.0.s8 %v718
        %v720 = vperm.slane %v712, %v719
        %v721 = vrot.slane %v692, 4
        %v722 = vsel %vm673, %v721, %v680
        %v723 = vrot.slane %v680, 4
        %v724 = vsel %vm673, %v692, %v723
        %v726 = vunpack.c.l.s4 1934713408
        %v727 = vunpack.c.0.s8 %v726
        %v728 = vperm.slane %v722, %v727
        %v730 = vunpack.c.l.s4 1934713408
        %v731 = vunpack.c.0.s8 %v730
        %v732 = vperm.slane %v724, %v731
        %v733 = vrot.slane %v696, 4
        %v734 = vsel %vm673, %v733, %v684
        %v735 = vrot.slane %v684, 4
        %v736 = vsel %vm673, %v696, %v735
        %v738 = vunpack.c.l.s4 1934713408
        %v739 = vunpack.c.0.s8 %v738
        %v740 = vperm.slane %v734, %v739
        %v742 = vunpack.c.l.s4 1934713408
        %v743 = vunpack.c.0.s8 %v742
        %v744 = vperm.slane %v736, %v743
        %v745 = vrot.slane %v716, 4
        %v746 = vsel %vm673, %v745, %v704
        %v747 = vrot.slane %v704, 4
        %v748 = vsel %vm673, %v716, %v747
        %v750 = vunpack.c.l.s4 1934713408
        %v751 = vunpack.c.0.s8 %v750
        %v752 = vperm.slane %v746, %v751
        %v754 = vunpack.c.l.s4 1934713408
        %v755 = vunpack.c.0.s8 %v754
        %v756 = vperm.slane %v748, %v755
        %v757 = vrot.slane %v720, 4
        %v758 = vsel %vm673, %v757, %v708
        %v759 = vrot.slane %v708, 4
        %v760 = vsel %vm673, %v720, %v759
        %v762 = vunpack.c.l.s4 1934713408
        %v763 = vunpack.c.0.s8 %v762
        %v764 = vperm.slane %v758, %v763
        %v766 = vunpack.c.l.s4 1934713408
        %v767 = vunpack.c.0.s8 %v766
        %v768 = vperm.slane %v760, %v767
        %v769 = vrot.slane %v752, 4
        %v770 = vsel %vm673, %v769, %v728
        %v771 = vrot.slane %v728, 4
        %v772 = vsel %vm673, %v752, %v771
        %v773 = vrot.slane %v756, 4
        %v774 = vsel %vm673, %v773, %v732
        %v775 = vrot.slane %v732, 4
        %v776 = vsel %vm673, %v756, %v775
        %v777 = vrot.slane %v764, 4
        %v778 = vsel %vm673, %v777, %v740
        %v779 = vrot.slane %v740, 4
        %v780 = vsel %vm673, %v764, %v779
        %v781 = vrot.slane %v768, 4
        %v782 = vsel %vm673, %v781, %v744
        %v783 = vrot.slane %v744, 4
        %v784 = vsel %vm673, %v768, %v783
        %786 = vrot.lane.b32.xlu0 %v772, 32
        %v787 = vpop.permute.xlu0 %786
        %790 = vrot.lane.b32.xlu0 %v774, 64
        %v791 = vpop.permute.xlu0 %790
        %794 = vrot.lane.b32.xlu0 %v776, 96
        %v795 = vpop.permute.xlu0 %794
        %798 = vrot.lane.b32.xlu0 %v780, 32
        %v799 = vpop.permute.xlu0 %798
        %802 = vrot.lane.b32.xlu0 %v782, 64
        %v803 = vpop.permute.xlu0 %802
        %806 = vrot.lane.b32.xlu0 %v784, 96
        %v807 = vpop.permute.xlu0 %806
        %vm809 = vcmask 261120
        %v810 = vsel %vm809, %v770, %v787
        %v811 = vsel %vm440, %v810, %v791
        %vm812 = vcmask 785408
        %v813 = vsel %vm812, %v811, %v795
        %v814 = vsel %vm809, %v778, %v799
        %v815 = vsel %vm440, %v814, %v803
        %v816 = vsel %vm812, %v815, %v807
        %817 = vst [vmem:[%s391] sm:$0xff] %v813
        %818 = vst [vmem:[%s391 + $0x8] sm:$0xff] %v816
        %s819 = sand.u32 %s286, 1
        %s820 = scalar_lea.sflag [#allocation3], %s819
        %s821 = sand.u32 %s286, 1
        %s822 = smul.addr %s821, 16
        %s823 = scalar_lea.vmem [#allocation2], %s822
        // Predicated region
        $region69: #{tpu_custom_call.1} parent=67 // pred_check
          %p824 = pneg %p296
        $region70: #{tpu_custom_call.1} parent=67 // pred_check_branch
          %826 = sbr.rel (%p824) target = $region72
        $region71: #{tpu_custom_call.1} parent=67 // pred_region
          %828 = vsyncadd %s820, 0
          %s829 = smul.addr %s26, 2
          %s830 = smul.addr %s829, 8
          %s831 = scalar_lea.hbm %s12, %s830
          %s833 = sshll.u32 %s823, 4
          %s834 = int_to_ptr.vmem [resolvable:$true] %s833
          %s835 = sshll.u32 %s831, 4
          %s836 = int_to_ptr.hbm [resolvable:$true] %s835
          %838 = dma.vmem_to_hbm [thread:$0]  %s834, 256, %s836, %s820
        $region72: #{tpu_custom_call.1} parent=67 // pred_fallthru
          _
      $region68: #{tpu_custom_call.1} parent=5 // pred_fallthru
        _
      %p839 = scmp.le.s32.totalorder 2, %s21
      // Predicated region
      $region73: #{tpu_custom_call.1} parent=5 // pred_check
        %p840 = pneg %p839
      $region74: #{tpu_custom_call.1} parent=5 // pred_check_branch
        %842 = sbr.rel (%p840) target = $region76
      $region75: #{tpu_custom_call.1} parent=5 // pred_region
        %s843 = ssub.s32 %s21, 2
        // Predicated region
        $region77: #{tpu_custom_call.1} parent=75 // pred_check
          %p844 = pneg %p302
        $region78: #{tpu_custom_call.1} parent=75 // pred_check_branch
          %846 = sbr.rel (%p844) target = $region80
        $region79: #{tpu_custom_call.1} parent=75 // pred_region
          %s847 = sand.u32 %s287, 1
          %s848 = scalar_lea.sflag [#allocation3], %s847
          %s849 = sand.u32 %s287, 1
          %s850 = smul.addr %s849, 16
          %s851 = scalar_lea.vmem [#allocation2], %s850
          %853 = dma.done %s848, 256
        $region80: #{tpu_custom_call.1} parent=75 // pred_fallthru
          _
      $region76: #{tpu_custom_call.1} parent=5 // pred_fallthru
        _
    $region6: #{tpu_custom_call.1} parent=1 // loop_footer
      %s25 = sadd.s32 1, %s21
    $region7: #{tpu_custom_call.1} parent=1 // loop_footer_branch
      %20 = sbr.rel target = $region3
    $region8: #{tpu_custom_call.1} parent=1 // loop_exit
      _
    %854 = vsyncpa [#allocation3], 1
    %s855 = scalar_lea.sflag [#allocation3], 1
    %856 = vsyncpa %s855, 1

</llo_original>
